<compile_context>
chip_gen: v5e
topology: v5e:2x2
jax: 0.10.0
libtpu: 0.0.40
codegen_flags: <defaults>
</compile_context>

<pallas_src>
import math

import jax
import jax.numpy as jnp
from jax.experimental import pallas as pl
from jax.experimental.pallas import tpu as pltpu


def _round_up(n, m):
    return ((n + m - 1) // m) * m


def _collapse_in_size(in_size):
    in_size = tuple(int(d) for d in in_size)
    if len(in_size) >= 4:
        in_size = (in_size[0], in_size[1], int(math.prod(in_size[2:])))
    return in_size


# ---------------------------------------------------------------------------
# Fused kernel factory.
#   scal_ref : SMEM f32[S]        -- all kron(w0,w1) entries, flattened
#   x_ref    : VMEM f32[R0,NB,C0] -- batch tile, "row" (a*B+b) leading
#   p_ref    : VMEM f32[P,W]      -- packed slab: per layer [w2^T ; bias]
#   o_ref    : VMEM f32[NB,Fout]
# ---------------------------------------------------------------------------
def _make_fused_kernel(layer_meta):
    r_in0 = layer_meta[0]["r_in"]

    def kernel(scal_ref, x_ref, p_ref, o_ref):
        # Per-"row" activation slabs h[j] : (NB, C_in), f32.
        h = [x_ref[j].astype(jnp.float32) for j in range(r_in0)]
        for lm in layer_meta:                                   # static unroll
            r_in, r_out = lm["r_in"], lm["r_out"]
            c_in, c_out = lm["c_in"], lm["c_out"]
            s0, wr, br = lm["s_off"], lm["w_row"], lm["b_row"]
            w2t = p_ref[wr:wr + c_in, 0:c_out]                  # (C_in, C_out)
            new_h = []
            for r in range(r_out):
                # modes 0+1 on the VPU: y = sum_j kron(w0,w1)[r,j] * h[j]
                y = h[0] * scal_ref[s0 + r * r_in]
                for j in range(1, r_in):
                    y = y + h[j] * scal_ref[s0 + r * r_in + j]
                # mode 2 on the MXU, M = batch tile
                z = jnp.dot(y, w2t, preferred_element_type=jnp.float32)
                b = p_ref[br + r:br + r + 1, 0:c_out]           # (1, C_out)
                new_h.append(jnp.maximum(z + b, 0.0))
            h = new_h
        out = h[0] if len(h) == 1 else jnp.concatenate(h, axis=-1)
        o_ref[...] = out.astype(o_ref.dtype)

    return kernel


# ---------------------------------------------------------------------------
# One-time parameter folding + packing (hoisted out of the per-call path).
# ---------------------------------------------------------------------------
def fold_kron_mlp_params(in_size, layers):
    in3 = _collapse_in_size(in_size)
    assert len(in3) == 3, "kernel is specialized to 3-mode KronLinear layers"

    slab_w = 128
    for (_, _, w2), _ in layers:
        slab_w = max(slab_w, _round_up(int(w2.shape[0]), 128))

    def pad2d(a, rows, cols):
        return jnp.pad(a, ((0, rows - a.shape[0]), (0, cols - a.shape[1])))

    cur = in3
    smem_parts, slab_parts, layer_meta = [], [], []
    smem_off, row = 0, 0
    for (w0, w1, w2), bias in layers:
        A, B, C = cur
        A2, B2, C2 = int(w0.shape[0]), int(w1.shape[0]), int(w2.shape[0])
        r_in, r_out = A * B, A2 * B2

        w01 = jnp.kron(w0, w1).astype(jnp.float32)              # (r_out, r_in)
        s_off = smem_off
        smem_parts.append(w01.reshape(-1))
        smem_off += r_out * r_in

        w2t = jnp.transpose(w2).astype(jnp.float32)             # (C, C2)
        w_rows = _round_up(C, 8)
        slab_parts.append(pad2d(w2t, w_rows, slab_w))
        w_row = row
        row += w_rows

        b2d = bias.reshape(r_out, C2).astype(jnp.float32)
        b_rows = _round_up(r_out, 8)
        slab_parts.append(pad2d(b2d, b_rows, slab_w))
        b_row = row
        row += b_rows

        layer_meta.append(dict(r_in=r_in, r_out=r_out, c_in=C, c_out=C2,
                               s_off=s_off, w_row=w_row, b_row=b_row))
        cur = (A2, B2, C2)

    scal = jnp.concatenate(smem_parts).astype(jnp.float32)
    slab = jnp.concatenate(slab_parts, axis=0)
    meta = dict(in3=in3, layers=layer_meta,
                out_w=layer_meta[-1]["r_out"] * layer_meta[-1]["c_out"])
    return scal, slab, meta


# ---------------------------------------------------------------------------
# Build the forward fn: fold once, return a jitted callable accepting either a
# single sample (module semantics) or a leading-batch stack of samples.
# ---------------------------------------------------------------------------
def make_kron_mlp_encoder_fn(in_size, layers, *, batch_tile=256):
    assert batch_tile % 8 == 0
    scal, slab, meta = fold_kron_mlp_params(in_size, layers)
    in3 = meta["in3"]
    r_in0, c_in0 = in3[0] * in3[1], in3[2]
    out_w = meta["out_w"]
    orig_ndim = len(tuple(in_size))
    kernel = _make_fused_kernel(meta["layers"])

    flops_per_sample = 0
    for lm in meta["layers"]:
        flops_per_sample += 2 * lm["r_out"] * lm["r_in"] * lm["c_in"]   # VPU
        flops_per_sample += 2 * lm["r_out"] * lm["c_in"] * lm["c_out"]  # MXU

    def fwd(x):
        single = (x.ndim == orig_ndim)
        xb = x[None] if single else x
        n = xb.shape[0]
        xb = xb.reshape(n, r_in0, c_in0).astype(jnp.float32)

        np_ = _round_up(max(n, 1), 8)
        nb = np_ if np_ <= batch_tile else batch_tile
        np_ = _round_up(np_, nb)
        if np_ != n:
            xb = jnp.pad(xb, ((0, np_ - n), (0, 0), (0, 0)))
        xk = jnp.transpose(xb, (1, 0, 2))                       # (R0, Np, C0)

        out = pl.pallas_call(
            kernel,
            out_shape=jax.ShapeDtypeStruct((np_, out_w), jnp.float32),
            grid=(np_ // nb,),
            in_specs=[
                pl.BlockSpec(memory_space=pltpu.MemorySpace.SMEM),     # scal
                pl.BlockSpec((r_in0, nb, c_in0), lambda i: (0, i, 0)),  # x
                pl.BlockSpec(slab.shape, lambda i: (0, 0)),             # slab
            ],
            out_specs=pl.BlockSpec((nb, out_w), lambda i: (i, 0)),
            compiler_params=pltpu.CompilerParams(
                dimension_semantics=("parallel",)),
            cost_estimate=pl.CostEstimate(
                flops=flops_per_sample * np_,
                transcendentals=0,
                bytes_accessed=int(4 * (r_in0 * np_ * c_in0 + slab.size
                                        + scal.size + np_ * out_w))),
        )(scal, xk, slab)

        out = out[:n]
        return out.reshape(-1) if single else out

    return jax.jit(fwd)


# ---------------------------------------------------------------------------
# Parameter construction (deterministic, mirrors KronMLPEncoder.__init__)
# ---------------------------------------------------------------------------
def _kaiming_uniform(key, out_f, in_f):
    # kaiming_uniform_(a=sqrt(5)) on (out_f, in_f) == U(-1/sqrt(in_f), 1/sqrt(in_f))
    bound = 1.0 / math.sqrt(in_f)
    return jax.random.uniform(key, (out_f, in_f), jnp.float32, -bound, bound)


def build_kron_mlp_encoder(in_size, hidden_shrink, key):
    """Returns (layers, out_features). layers = [((w0,w1,w2), bias), ...]."""
    cur = _collapse_in_size(in_size)
    layers = []
    for shrink in hidden_shrink:
        out = tuple(max(d // shrink, 1) for d in cur)
        ws = []
        for o, i in zip(out, cur):
            key, sub = jax.random.split(key)
            ws.append(_kaiming_uniform(sub, o, i))
        bias = jnp.zeros(out, jnp.float32)          # nn.init.zeros_ on bias
        layers.append((tuple(ws), bias))
        cur = out
    return layers, int(math.prod(cur))


# ---------------------------------------------------------------------------
# Plain-JAX per-sample reference (unfused, unfolded — matches PyTorch exactly)
# ---------------------------------------------------------------------------
def kron_mlp_encoder_ref(x, layers):
    x = x.reshape(x.shape[0], x.shape[1], -1)
    for (w0, w1, w2), bias in layers:
        x = jnp.einsum('ij,jbc->ibc', w0, x)
        x = jnp.einsum('ij,ajc->aic', w1, x)
        x = jnp.einsum('ij,abj->abi', w2, x)
        x = jnp.maximum(x + bias, 0.0)
    return x.reshape(-1)


# TODO(synk): activation is hardcoded to ReLU (the module's default); arbitrary
# `activation` callables are not translated.

if __name__ == "__main__":
    key = jax.random.PRNGKey(0)
    k_x, k_xb, k_p = jax.random.split(key, 3)

    in_size = (2, 4, 16, 16)
    hidden_shrink = (2, 2)

    layers, out_features = build_kron_mlp_encoder(in_size, hidden_shrink, k_p)
    fwd = make_kron_mlp_encoder_fn(in_size, layers)   # fold + jit once

    # Single-sample path: exactly the PyTorch module's forward semantics.
    x = jax.random.normal(k_x, in_size, jnp.float32)
    out = jax.block_until_ready(fwd(x))
    assert out.shape == (out_features,), (out.shape, out_features)
    ref = kron_mlp_encoder_ref(x, layers)
    assert jnp.allclose(out, ref, rtol=1e-4, atol=1e-4), float(
        jnp.max(jnp.abs(out - ref)))

    # Batched path (review opt 1): whole batch in one fused pallas_call.
    batch = 16
    xb = jax.random.normal(k_xb, (batch,) + in_size, jnp.float32)
    outb = jax.block_until_ready(fwd(xb))
    assert outb.shape == (batch, out_features), outb.shape
    refb = jax.vmap(lambda s: kron_mlp_encoder_ref(s, layers))(xb)
    assert jnp.allclose(outb, refb, rtol=1e-4, atol=1e-4), float(
        jnp.max(jnp.abs(outb - refb)))

    print("KERNEL_OK")
</pallas_src>

<mosaic_0001>
module attributes {stable_mosaic.version = 11 : i64} {
  func.func @kernel(%arg0: i32, %arg1: memref<18xf32, #tpu.memory_space<smem>>, %arg2: memref<8x8x256xf32, #tpu.memory_space<vmem>>, %arg3: memref<400x128xf32, #tpu.memory_space<vmem>>, %arg4: memref<8x64xf32, #tpu.memory_space<vmem>>) attributes {dimension_semantics = [#tpu.dimension_semantics<parallel>], iteration_bounds = array<i64: 1>, scalar_prefetch = 0 : i64, scratch_operands = 0 : i64, tpu.core_type = #tpu.core_type<tc>, window_params = [{transform_indices = @transform_0, window_bounds = array<i64: 18>}, {transform_indices = @transform_1, window_bounds = array<i64: 8, 8, 256>}, {pipeline_mode = #tpu.pipeline_mode<synchronous>, transform_indices = @transform_2, window_bounds = array<i64: 400, 128>}, {transform_indices = @transform_3, window_bounds = array<i64: 8, 64>}]} {
    %c0 = arith.constant 0 : index
    %c0_0 = arith.constant 0 : index
    %c0_1 = arith.constant 0 : index
    %0 = vector.load %arg2[%c0, %c0_0, %c0_1] : memref<8x8x256xf32, #tpu.memory_space<vmem>>, vector<1x8x256xf32>
    %1 = vector.shape_cast %0 : vector<1x8x256xf32> to vector<8x256xf32>
    %c1 = arith.constant 1 : index
    %c0_2 = arith.constant 0 : index
    %c0_3 = arith.constant 0 : index
    %2 = vector.load %arg2[%c1, %c0_2, %c0_3] : memref<8x8x256xf32, #tpu.memory_space<vmem>>, vector<1x8x256xf32>
    %3 = vector.shape_cast %2 : vector<1x8x256xf32> to vector<8x256xf32>
    %c2 = arith.constant 2 : index
    %c0_4 = arith.constant 0 : index
    %c0_5 = arith.constant 0 : index
    %4 = vector.load %arg2[%c2, %c0_4, %c0_5] : memref<8x8x256xf32, #tpu.memory_space<vmem>>, vector<1x8x256xf32>
    %5 = vector.shape_cast %4 : vector<1x8x256xf32> to vector<8x256xf32>
    %c3 = arith.constant 3 : index
    %c0_6 = arith.constant 0 : index
    %c0_7 = arith.constant 0 : index
    %6 = vector.load %arg2[%c3, %c0_6, %c0_7] : memref<8x8x256xf32, #tpu.memory_space<vmem>>, vector<1x8x256xf32>
    %7 = vector.shape_cast %6 : vector<1x8x256xf32> to vector<8x256xf32>
    %c4 = arith.constant 4 : index
    %c0_8 = arith.constant 0 : index
    %c0_9 = arith.constant 0 : index
    %8 = vector.load %arg2[%c4, %c0_8, %c0_9] : memref<8x8x256xf32, #tpu.memory_space<vmem>>, vector<1x8x256xf32>
    %9 = vector.shape_cast %8 : vector<1x8x256xf32> to vector<8x256xf32>
    %c5 = arith.constant 5 : index
    %c0_10 = arith.constant 0 : index
    %c0_11 = arith.constant 0 : index
    %10 = vector.load %arg2[%c5, %c0_10, %c0_11] : memref<8x8x256xf32, #tpu.memory_space<vmem>>, vector<1x8x256xf32>
    %11 = vector.shape_cast %10 : vector<1x8x256xf32> to vector<8x256xf32>
    %c6 = arith.constant 6 : index
    %c0_12 = arith.constant 0 : index
    %c0_13 = arith.constant 0 : index
    %12 = vector.load %arg2[%c6, %c0_12, %c0_13] : memref<8x8x256xf32, #tpu.memory_space<vmem>>, vector<1x8x256xf32>
    %13 = vector.shape_cast %12 : vector<1x8x256xf32> to vector<8x256xf32>
    %c7 = arith.constant 7 : index
    %c0_14 = arith.constant 0 : index
    %c0_15 = arith.constant 0 : index
    %14 = vector.load %arg2[%c7, %c0_14, %c0_15] : memref<8x8x256xf32, #tpu.memory_space<vmem>>, vector<1x8x256xf32>
    %15 = vector.shape_cast %14 : vector<1x8x256xf32> to vector<8x256xf32>
    %c0_16 = arith.constant 0 : index
    %c0_17 = arith.constant 0 : index
    %16 = vector.load %arg3[%c0_16, %c0_17] : memref<400x128xf32, #tpu.memory_space<vmem>>, vector<256x128xf32>
    %c0_18 = arith.constant 0 : index
    %17 = memref.load %arg1[%c0_18] : memref<18xf32, #tpu.memory_space<smem>>
    %18 = vector.broadcast %17 : f32 to vector<8x256xf32>
    %19 = arith.mulf %1, %18 : vector<8x256xf32>
    %c1_19 = arith.constant 1 : index
    %20 = memref.load %arg1[%c1_19] : memref<18xf32, #tpu.memory_space<smem>>
    %21 = vector.broadcast %20 : f32 to vector<8x256xf32>
    %22 = arith.mulf %3, %21 : vector<8x256xf32>
    %23 = arith.addf %19, %22 : vector<8x256xf32>
    %c2_20 = arith.constant 2 : index
    %24 = memref.load %arg1[%c2_20] : memref<18xf32, #tpu.memory_space<smem>>
    %25 = vector.broadcast %24 : f32 to vector<8x256xf32>
    %26 = arith.mulf %5, %25 : vector<8x256xf32>
    %27 = arith.addf %23, %26 : vector<8x256xf32>
    %c3_21 = arith.constant 3 : index
    %28 = memref.load %arg1[%c3_21] : memref<18xf32, #tpu.memory_space<smem>>
    %29 = vector.broadcast %28 : f32 to vector<8x256xf32>
    %30 = arith.mulf %7, %29 : vector<8x256xf32>
    %31 = arith.addf %27, %30 : vector<8x256xf32>
    %c4_22 = arith.constant 4 : index
    %32 = memref.load %arg1[%c4_22] : memref<18xf32, #tpu.memory_space<smem>>
    %33 = vector.broadcast %32 : f32 to vector<8x256xf32>
    %34 = arith.mulf %9, %33 : vector<8x256xf32>
    %35 = arith.addf %31, %34 : vector<8x256xf32>
    %c5_23 = arith.constant 5 : index
    %36 = memref.load %arg1[%c5_23] : memref<18xf32, #tpu.memory_space<smem>>
    %37 = vector.broadcast %36 : f32 to vector<8x256xf32>
    %38 = arith.mulf %11, %37 : vector<8x256xf32>
    %39 = arith.addf %35, %38 : vector<8x256xf32>
    %c6_24 = arith.constant 6 : index
    %40 = memref.load %arg1[%c6_24] : memref<18xf32, #tpu.memory_space<smem>>
    %41 = vector.broadcast %40 : f32 to vector<8x256xf32>
    %42 = arith.mulf %13, %41 : vector<8x256xf32>
    %43 = arith.addf %39, %42 : vector<8x256xf32>
    %c7_25 = arith.constant 7 : index
    %44 = memref.load %arg1[%c7_25] : memref<18xf32, #tpu.memory_space<smem>>
    %45 = vector.broadcast %44 : f32 to vector<8x256xf32>
    %46 = arith.mulf %15, %45 : vector<8x256xf32>
    %47 = arith.addf %43, %46 : vector<8x256xf32>
    %cst = arith.constant dense<0.000000e+00> : vector<8x128xf32>
    %48 = tpu.matmul %47, %16, %cst {dimension_numbers = #tpu.dot_dimension_numbers<[1], [0], [0], [1], [0, 0, 1, 1], [], []>} : vector<8x256xf32>, vector<256x128xf32>, vector<8x128xf32> -> vector<8x128xf32>
    %c256 = arith.constant 256 : index
    %c0_26 = arith.constant 0 : index
    %49 = vector.load %arg3[%c256, %c0_26] : memref<400x128xf32, #tpu.memory_space<vmem>>, vector<1x128xf32>
    %50 = vector.broadcast %49 : vector<1x128xf32> to vector<8x128xf32>
    %51 = arith.addf %48, %50 : vector<8x128xf32>
    %cst_27 = arith.constant 0.000000e+00 : f32
    %52 = vector.broadcast %cst_27 : f32 to vector<8x128xf32>
    %53 = arith.maximumf %51, %52 : vector<8x128xf32>
    %c8 = arith.constant 8 : index
    %54 = memref.load %arg1[%c8] : memref<18xf32, #tpu.memory_space<smem>>
    %55 = vector.broadcast %54 : f32 to vector<8x256xf32>
    %56 = arith.mulf %1, %55 : vector<8x256xf32>
    %c9 = arith.constant 9 : index
    %57 = memref.load %arg1[%c9] : memref<18xf32, #tpu.memory_space<smem>>
    %58 = vector.broadcast %57 : f32 to vector<8x256xf32>
    %59 = arith.mulf %3, %58 : vector<8x256xf32>
    %60 = arith.addf %56, %59 : vector<8x256xf32>
    %c10 = arith.constant 10 : index
    %61 = memref.load %arg1[%c10] : memref<18xf32, #tpu.memory_space<smem>>
    %62 = vector.broadcast %61 : f32 to vector<8x256xf32>
    %63 = arith.mulf %5, %62 : vector<8x256xf32>
    %64 = arith.addf %60, %63 : vector<8x256xf32>
    %c11 = arith.constant 11 : index
    %65 = memref.load %arg1[%c11] : memref<18xf32, #tpu.memory_space<smem>>
    %66 = vector.broadcast %65 : f32 to vector<8x256xf32>
    %67 = arith.mulf %7, %66 : vector<8x256xf32>
    %68 = arith.addf %64, %67 : vector<8x256xf32>
    %c12 = arith.constant 12 : index
    %69 = memref.load %arg1[%c12] : memref<18xf32, #tpu.memory_space<smem>>
    %70 = vector.broadcast %69 : f32 to vector<8x256xf32>
    %71 = arith.mulf %9, %70 : vector<8x256xf32>
    %72 = arith.addf %68, %71 : vector<8x256xf32>
    %c13 = arith.constant 13 : index
    %73 = memref.load %arg1[%c13] : memref<18xf32, #tpu.memory_space<smem>>
    %74 = vector.broadcast %73 : f32 to vector<8x256xf32>
    %75 = arith.mulf %11, %74 : vector<8x256xf32>
    %76 = arith.addf %72, %75 : vector<8x256xf32>
    %c14 = arith.constant 14 : index
    %77 = memref.load %arg1[%c14] : memref<18xf32, #tpu.memory_space<smem>>
    %78 = vector.broadcast %77 : f32 to vector<8x256xf32>
    %79 = arith.mulf %13, %78 : vector<8x256xf32>
    %80 = arith.addf %76, %79 : vector<8x256xf32>
    %c15 = arith.constant 15 : index
    %81 = memref.load %arg1[%c15] : memref<18xf32, #tpu.memory_space<smem>>
    %82 = vector.broadcast %81 : f32 to vector<8x256xf32>
    %83 = arith.mulf %15, %82 : vector<8x256xf32>
    %84 = arith.addf %80, %83 : vector<8x256xf32>
    %cst_28 = arith.constant dense<0.000000e+00> : vector<8x128xf32>
    %85 = tpu.matmul %84, %16, %cst_28 {dimension_numbers = #tpu.dot_dimension_numbers<[1], [0], [0], [1], [0, 0, 1, 1], [], []>} : vector<8x256xf32>, vector<256x128xf32>, vector<8x128xf32> -> vector<8x128xf32>
    %c257 = arith.constant 257 : index
    %c0_29 = arith.constant 0 : index
    %86 = vector.load %arg3[%c257, %c0_29] : memref<400x128xf32, #tpu.memory_space<vmem>>, vector<1x128xf32>
    %87 = vector.broadcast %86 : vector<1x128xf32> to vector<8x128xf32>
    %88 = arith.addf %85, %87 : vector<8x128xf32>
    %cst_30 = arith.constant 0.000000e+00 : f32
    %89 = vector.broadcast %cst_30 : f32 to vector<8x128xf32>
    %90 = arith.maximumf %88, %89 : vector<8x128xf32>
    %c264 = arith.constant 264 : index
    %c0_31 = arith.constant 0 : index
    %91 = vector.load %arg3[%c264, %c0_31] : memref<400x128xf32, #tpu.memory_space<vmem>>, vector<128x64xf32>
    %c16 = arith.constant 16 : index
    %92 = memref.load %arg1[%c16] : memref<18xf32, #tpu.memory_space<smem>>
    %93 = vector.broadcast %92 : f32 to vector<8x128xf32>
    %94 = arith.mulf %53, %93 : vector<8x128xf32>
    %c17 = arith.constant 17 : index
    %95 = memref.load %arg1[%c17] : memref<18xf32, #tpu.memory_space<smem>>
    %96 = vector.broadcast %95 : f32 to vector<8x128xf32>
    %97 = arith.mulf %90, %96 : vector<8x128xf32>
    %98 = arith.addf %94, %97 : vector<8x128xf32>
    %cst_32 = arith.constant dense<0.000000e+00> : vector<8x64xf32>
    %99 = tpu.matmul %98, %91, %cst_32 {dimension_numbers = #tpu.dot_dimension_numbers<[1], [0], [0], [1], [0, 0, 1, 1], [], []>} : vector<8x128xf32>, vector<128x64xf32>, vector<8x64xf32> -> vector<8x64xf32>
    %c392 = arith.constant 392 : index
    %c0_33 = arith.constant 0 : index
    %100 = vector.load %arg3[%c392, %c0_33] : memref<400x128xf32, #tpu.memory_space<vmem>>, vector<1x64xf32>
    %101 = vector.broadcast %100 : vector<1x64xf32> to vector<8x64xf32>
    %102 = arith.addf %99, %101 : vector<8x64xf32>
    %cst_34 = arith.constant 0.000000e+00 : f32
    %103 = vector.broadcast %cst_34 : f32 to vector<8x64xf32>
    %104 = arith.maximumf %102, %103 : vector<8x64xf32>
    %c0_35 = arith.constant 0 : index
    %c0_36 = arith.constant 0 : index
    %105 = vector.load %arg4[%c0_35, %c0_36] : memref<8x64xf32, #tpu.memory_space<vmem>>, vector<8x64xf32>
    tpu.vector_store %arg4[%c0_35, %c0_36], %104 {strides = array<i32>} : memref<8x64xf32, #tpu.memory_space<vmem>>, vector<8x64xf32>,
    return
  }
  func.func @transform_0(%arg0: i32) -> i32 {
    %c0_i32 = arith.constant 0 : i32
    %c0_i32_0 = arith.constant 0 : i32
    return %c0_i32 : i32
  }
  func.func @transform_1(%arg0: i32) -> (i32, i32, i32) {
    %c0_i32 = arith.constant 0 : i32
    %c0_i32_0 = arith.constant 0 : i32
    %c0_i32_1 = arith.constant 0 : i32
    return %c0_i32, %arg0, %c0_i32_0 : i32, i32, i32
  }
  func.func @transform_2(%arg0: i32) -> (i32, i32) {
    %c0_i32 = arith.constant 0 : i32
    %c0_i32_0 = arith.constant 0 : i32
    %c0_i32_1 = arith.constant 0 : i32
    return %c0_i32, %c0_i32_0 : i32, i32
  }
  func.func @transform_3(%arg0: i32) -> (i32, i32) {
    %c0_i32 = arith.constant 0 : i32
    %c0_i32_0 = arith.constant 0 : i32
    return %arg0, %c0_i32 : i32, i32
  }
}

</mosaic_0001>

<llo_original>
// kernel: fwd.1
$region0: #{fwd.1}
  #allocation0 [shape = 'u32[]', space=smem, size = 0x4, offset = 0x4, fixed_abs, tag = 'smem constant byte address 0x4 - core index']
  #allocation1 [shape = 'u32[72,128]{1,0:T(1,128)}', space=vmem, size = 0x9000, scoped, tag = 'internal scratch']
  %s0 = inlined_call_operand.vmem [shape: f32[18], index: 0, kind: input, shape index: {}]
  %s1 = inlined_call_operand.vmem [shape: f32[8,8,256], index: 1, kind: input, shape index: {}]
  %s2 = inlined_call_operand.hbm [shape: f32[400,128], index: 2, kind: input, shape index: {}]
  %s3 = inlined_call_operand.vmem [shape: f32[8,64], index: 3, kind: output, shape index: {}]
  %s4 = sld [smem:[#allocation0]]
  $region30: #{fwd.1} parent=0
    _
  %s6 = ssub.s32 1, %s4
  %s7 = scalar_select 0, %s6, %s4
  $region1: #{fwd.1} parent=0
    #allocation2 [shape = 'u8[512]{0}', space=smem, size = 0x200, scoped, tag = 'input window, operand 0, single buffered']
    #allocation3 [shape = 's32[1]{0}', space=sflag, size = 0x4, scoped, tag = 'scoped memory for fwd.1']
    #allocation4 [shape = 's32[1]{0}', space=sflag, size = 0x4, scoped, tag = 'scoped memory for fwd.1']
    #allocation5 [shape = 'u8[204800]{0}', space=vmem, size = 0x32000, scoped, tag = 'input window, operand 2, single buffered']
    %8 = vsyncpa [#allocation4], 0
    %9 = vsyncpa [#allocation3], 0
    // Predicated region
    $region2: #{fwd.1} parent=1 // pred_check
      _
    $region3: #{fwd.1} parent=1 // pred_check_branch
      %11 = sbr.rel (0) target = $region5
    $region4: #{fwd.1} parent=1 // pred_region
      %13 = vsyncadd [#allocation4], 0
      %s15 = sshll.u32 %s0, 4
      %s16 = int_to_ptr.vmem [resolvable:$true] %s15
      %18 = dma.vmem_to_smem %s16, 16, [#allocation2], [#allocation4]
    $region5: #{fwd.1} parent=1 // pred_fallthru
      _
    // Predicated region
    $region6: #{fwd.1} parent=1 // pred_check
      _
    $region7: #{fwd.1} parent=1 // pred_check_branch
      %20 = sbr.rel (0) target = $region9
    $region8: #{fwd.1} parent=1 // pred_region
      _
    $region9: #{fwd.1} parent=1 // pred_fallthru
      _
    // Predicated region
    $region10: #{fwd.1} parent=1 // pred_check
      _
    $region11: #{fwd.1} parent=1 // pred_check_branch
      %22 = sbr.rel (0) target = $region13
    $region12: #{fwd.1} parent=1 // pred_region
      %24 = vsyncadd [#allocation3], 0
      %s25 = sshll.u32 %s2, 4
      %s26 = int_to_ptr.hbm [resolvable:$true] %s25
      %s27 = sshll.u32 [#allocation5], 4
      %s28 = int_to_ptr.vmem [resolvable:$true] %s27
      %33 = dma.hbm_to_vmem [thread:$0]  %s26, 6400, %s28, [#allocation3], 128, 128, 8
    $region13: #{fwd.1} parent=1 // pred_fallthru
      _
    // Predicated region
    $region14: #{fwd.1} parent=1 // pred_check
      _
    $region15: #{fwd.1} parent=1 // pred_check_branch
      %35 = sbr.rel (0) target = $region17
    $region16: #{fwd.1} parent=1 // pred_region
      %37 = dma.done [#allocation4], 16
    $region17: #{fwd.1} parent=1 // pred_fallthru
      _
    // Predicated region
    $region18: #{fwd.1} parent=1 // pred_check
      _
    $region19: #{fwd.1} parent=1 // pred_check_branch
      %39 = sbr.rel (0) target = $region21
    $region20: #{fwd.1} parent=1 // pred_region
      %41 = dma.done [#allocation3], 6400
    $region21: #{fwd.1} parent=1 // pred_fallthru
      _
    %42 = sfence
    %v43 = vld [vmem:[%s1] sm:$0xff]
    %v44 = vld [vmem:[%s1 + $0x8] sm:$0xff]
    %s45 = scalar_lea.vmem %s1, 16
    %v46 = vld [vmem:[%s45] sm:$0xff]
    %v47 = vld [vmem:[%s45 + $0x8] sm:$0xff]
    %s48 = scalar_lea.vmem %s1, 32
    %v49 = vld [vmem:[%s48] sm:$0xff]
    %v50 = vld [vmem:[%s48 + $0x8] sm:$0xff]
    %s51 = scalar_lea.vmem %s1, 48
    %v52 = vld [vmem:[%s51] sm:$0xff]
    %v53 = vld [vmem:[%s51 + $0x8] sm:$0xff]
    %s54 = scalar_lea.vmem %s1, 64
    %v55 = vld [vmem:[%s54] sm:$0xff]
    %v56 = vld [vmem:[%s54 + $0x8] sm:$0xff]
    %s57 = scalar_lea.vmem %s1, 80
    %v58 = vld [vmem:[%s57] sm:$0xff]
    %v59 = vld [vmem:[%s57 + $0x8] sm:$0xff]
    %s60 = scalar_lea.vmem %s1, 96
    %v61 = vld [vmem:[%s60] sm:$0xff]
    %v62 = vld [vmem:[%s60 + $0x8] sm:$0xff]
    %s63 = scalar_lea.vmem %s1, 112
    %v64 = vld [vmem:[%s63] sm:$0xff]
    %v65 = vld [vmem:[%s63 + $0x8] sm:$0xff]
    %v66 = vld [vmem:[#allocation5] sm:$0xff]
    %v67 = vld [vmem:[#allocation5 + $0x8] sm:$0xff]
    %v68 = vld [vmem:[#allocation5 + $0x10] sm:$0xff]
    %v69 = vld [vmem:[#allocation5 + $0x18] sm:$0xff]
    %v70 = vld [vmem:[#allocation5 + $0x20] sm:$0xff]
    %v71 = vld [vmem:[#allocation5 + $0x28] sm:$0xff]
    %v72 = vld [vmem:[#allocation5 + $0x30] sm:$0xff]
    %v73 = vld [vmem:[#allocation5 + $0x38] sm:$0xff]
    %v74 = vld [vmem:[#allocation5 + $0x40] sm:$0xff]
    %v75 = vld [vmem:[#allocation5 + $0x48] sm:$0xff]
    %v76 = vld [vmem:[#allocation5 + $0x50] sm:$0xff]
    %v77 = vld [vmem:[#allocation5 + $0x58] sm:$0xff]
    %v78 = vld [vmem:[#allocation5 + $0x60] sm:$0xff]
    %v79 = vld [vmem:[#allocation5 + $0x68] sm:$0xff]
    %v80 = vld [vmem:[#allocation5 + $0x70] sm:$0xff]
    %v81 = vld [vmem:[#allocation5 + $0x78] sm:$0xff]
    %v82 = vld [vmem:[#allocation5 + $0x80] sm:$0xff]
    %v83 = vld [vmem:[#allocation5 + $0x88] sm:$0xff]
    %v84 = vld [vmem:[#allocation5 + $0x90] sm:$0xff]
    %v85 = vld [vmem:[#allocation5 + $0x98] sm:$0xff]
    %v86 = vld [vmem:[#allocation5 + $0xa0] sm:$0xff]
    %v87 = vld [vmem:[#allocation5 + $0xa8] sm:$0xff]
    %v88 = vld [vmem:[#allocation5 + $0xb0] sm:$0xff]
    %v89 = vld [vmem:[#allocation5 + $0xb8] sm:$0xff]
    %v90 = vld [vmem:[#allocation5 + $0xc0] sm:$0xff]
    %v91 = vld [vmem:[#allocation5 + $0xc8] sm:$0xff]
    %v92 = vld [vmem:[#allocation5 + $0xd0] sm:$0xff]
    %v93 = vld [vmem:[#allocation5 + $0xd8] sm:$0xff]
    %v94 = vld [vmem:[#allocation5 + $0xe0] sm:$0xff]
    %v95 = vld [vmem:[#allocation5 + $0xe8] sm:$0xff]
    %v96 = vld [vmem:[#allocation5 + $0xf0] sm:$0xff]
    %v97 = vld [vmem:[#allocation5 + $0xf8] sm:$0xff]
    %s98 = sld [smem:[#allocation2]]
    %v99 = vstv %s98
    %v100 = vmul.f32 %v43, %v99
    %v101 = vmul.f32 %v44, %v99
    %s102 = sld [smem:[#allocation2 + $0x1]]
    %v103 = vstv %s102
    %v104 = vmul.f32 %v46, %v103
    %v105 = vmul.f32 %v47, %v103
    %v106 = vadd.f32 %v100, %v104
    %v107 = vadd.f32 %v101, %v105
    %s108 = sld [smem:[#allocation2 + $0x2]]
    %v109 = vstv %s108
    %v110 = vmul.f32 %v49, %v109
    %v111 = vmul.f32 %v50, %v109
    %v112 = vadd.f32 %v106, %v110
    %v113 = vadd.f32 %v107, %v111
    %s114 = sld [smem:[#allocation2 + $0x3]]
    %v115 = vstv %s114
    %v116 = vmul.f32 %v52, %v115
    %v117 = vmul.f32 %v53, %v115
    %v118 = vadd.f32 %v112, %v116
    %v119 = vadd.f32 %v113, %v117
    %s120 = sld [smem:[#allocation2 + $0x4]]
    %v121 = vstv %s120
    %v122 = vmul.f32 %v55, %v121
    %v123 = vmul.f32 %v56, %v121
    %v124 = vadd.f32 %v118, %v122
    %v125 = vadd.f32 %v119, %v123
    %s126 = sld [smem:[#allocation2 + $0x5]]
    %v127 = vstv %s126
    %v128 = vmul.f32 %v58, %v127
    %v129 = vmul.f32 %v59, %v127
    %v130 = vadd.f32 %v124, %v128
    %v131 = vadd.f32 %v125, %v129
    %s132 = sld [smem:[#allocation2 + $0x6]]
    %v133 = vstv %s132
    %v134 = vmul.f32 %v61, %v133
    %v135 = vmul.f32 %v62, %v133
    %v136 = vadd.f32 %v130, %v134
    %v137 = vadd.f32 %v131, %v135
    %s138 = sld [smem:[#allocation2 + $0x7]]
    %v139 = vstv %s138
    %v140 = vmul.f32 %v64, %v139
    %v141 = vmul.f32 %v65, %v139
    %v142 = vadd.f32 %v136, %v140
    %v143 = vadd.f32 %v137, %v141
    %v144 = vld [vmem:[#allocation5 + $0x100] sm:$0x1]
    %v145 = vperm.slane %v144, 0
    %146 = vmatpush.msra.mxu0 %v81
    %147 = vmatpush.msra.mxu0 %v80
    %148 = vmatpush.msra.mxu0 %v79
    %149 = vmatpush.msra.mxu0 %v78
    %150 = vmatpush.msra.mxu0 %v77
    %151 = vmatpush.msra.mxu0 %v76
    %152 = vmatpush.msra.mxu0 %v75
    %153 = vmatpush.msra.mxu0 %v74
    %154 = vmatpush.msra.mxu0 %v73
    %155 = vmatpush.msra.mxu0 %v72
    %156 = vmatpush.msra.mxu0 %v71
    %157 = vmatpush.msra.mxu0 %v70
    %158 = vmatpush.msra.mxu0 %v69
    %159 = vmatpush.msra.mxu0 %v68
    %160 = vmatpush.msra.mxu0 %v67
    %161 = vmatpush.msra.mxu0 %v66
    %162 = vmatmul.f32.gmra.mxu0 %v142
    %v163 = vpop.f32.mrf.mxu0
    %v164 = vadd.f32 %v145, %v163
    %165 = vdwg.mxu0
    %166 = vmatpush.msra.mxu0 %v97
    %167 = vmatpush.msra.mxu0 %v96
    %168 = vmatpush.msra.mxu0 %v95
    %169 = vmatpush.msra.mxu0 %v94
    %170 = vmatpush.msra.mxu0 %v93
    %171 = vmatpush.msra.mxu0 %v92
    %172 = vmatpush.msra.mxu0 %v91
    %173 = vmatpush.msra.mxu0 %v90
    %174 = vmatpush.msra.mxu0 %v89
    %175 = vmatpush.msra.mxu0 %v88
    %176 = vmatpush.msra.mxu0 %v87
    %177 = vmatpush.msra.mxu0 %v86
    %178 = vmatpush.msra.mxu0 %v85
    %179 = vmatpush.msra.mxu0 %v84
    %180 = vmatpush.msra.mxu0 %v83
    %181 = vmatpush.msra.mxu0 %v82
    %182 = vmatmul.f32.gmra.mxu0 %v143
    %v183 = vpop.f32.mrf.mxu0
    %v184 = vadd.f32 %v164, %v183
    %185 = vdwg.mxu0
    %v186 = vmax.f32 %v184, 0.0
    %s187 = sld [smem:[#allocation2 + $0x8]]
    %v188 = vstv %s187
    %v189 = vmul.f32 %v43, %v188
    %v190 = vmul.f32 %v44, %v188
    %s191 = sld [smem:[#allocation2 + $0x9]]
    %v192 = vstv %s191
    %v193 = vmul.f32 %v46, %v192
    %v194 = vmul.f32 %v47, %v192
    %v195 = vadd.f32 %v189, %v193
    %v196 = vadd.f32 %v190, %v194
    %s197 = sld [smem:[#allocation2 + $0xa]]
    %v198 = vstv %s197
    %v199 = vmul.f32 %v49, %v198
    %v200 = vmul.f32 %v50, %v198
    %v201 = vadd.f32 %v195, %v199
    %v202 = vadd.f32 %v196, %v200
    %s203 = sld [smem:[#allocation2 + $0xb]]
    %v204 = vstv %s203
    %v205 = vmul.f32 %v52, %v204
    %v206 = vmul.f32 %v53, %v204
    %v207 = vadd.f32 %v201, %v205
    %v208 = vadd.f32 %v202, %v206
    %s209 = sld [smem:[#allocation2 + $0xc]]
    %v210 = vstv %s209
    %v211 = vmul.f32 %v55, %v210
    %v212 = vmul.f32 %v56, %v210
    %v213 = vadd.f32 %v207, %v211
    %v214 = vadd.f32 %v208, %v212
    %s215 = sld [smem:[#allocation2 + $0xd]]
    %v216 = vstv %s215
    %v217 = vmul.f32 %v58, %v216
    %v218 = vmul.f32 %v59, %v216
    %v219 = vadd.f32 %v213, %v217
    %v220 = vadd.f32 %v214, %v218
    %s221 = sld [smem:[#allocation2 + $0xe]]
    %v222 = vstv %s221
    %v223 = vmul.f32 %v61, %v222
    %v224 = vmul.f32 %v62, %v222
    %v225 = vadd.f32 %v219, %v223
    %v226 = vadd.f32 %v220, %v224
    %s227 = sld [smem:[#allocation2 + $0xf]]
    %v228 = vstv %s227
    %v229 = vmul.f32 %v64, %v228
    %v230 = vmul.f32 %v65, %v228
    %v231 = vadd.f32 %v225, %v229
    %v232 = vadd.f32 %v226, %v230
    %v233 = vld [vmem:[#allocation5 + $0x101] sm:$0x1]
    %v234 = vperm.slane %v233, 0
    %235 = vmatpush.msra.mxu0 %v81
    %236 = vmatpush.msra.mxu0 %v80
    %237 = vmatpush.msra.mxu0 %v79
    %238 = vmatpush.msra.mxu0 %v78
    %239 = vmatpush.msra.mxu0 %v77
    %240 = vmatpush.msra.mxu0 %v76
    %241 = vmatpush.msra.mxu0 %v75
    %242 = vmatpush.msra.mxu0 %v74
    %243 = vmatpush.msra.mxu0 %v73
    %244 = vmatpush.msra.mxu0 %v72
    %245 = vmatpush.msra.mxu0 %v71
    %246 = vmatpush.msra.mxu0 %v70
    %247 = vmatpush.msra.mxu0 %v69
    %248 = vmatpush.msra.mxu0 %v68
    %249 = vmatpush.msra.mxu0 %v67
    %250 = vmatpush.msra.mxu0 %v66
    %251 = vmatmul.f32.gmra.mxu0 %v231
    %v252 = vpop.f32.mrf.mxu0
    %v253 = vadd.f32 %v234, %v252
    %254 = vdwg.mxu0
    %255 = vmatpush.msra.mxu0 %v97
    %256 = vmatpush.msra.mxu0 %v96
    %257 = vmatpush.msra.mxu0 %v95
    %258 = vmatpush.msra.mxu0 %v94
    %259 = vmatpush.msra.mxu0 %v93
    %260 = vmatpush.msra.mxu0 %v92
    %261 = vmatpush.msra.mxu0 %v91
    %262 = vmatpush.msra.mxu0 %v90
    %263 = vmatpush.msra.mxu0 %v89
    %264 = vmatpush.msra.mxu0 %v88
    %265 = vmatpush.msra.mxu0 %v87
    %266 = vmatpush.msra.mxu0 %v86
    %267 = vmatpush.msra.mxu0 %v85
    %268 = vmatpush.msra.mxu0 %v84
    %269 = vmatpush.msra.mxu0 %v83
    %270 = vmatpush.msra.mxu0 %v82
    %271 = vmatmul.f32.gmra.mxu0 %v232
    %v272 = vpop.f32.mrf.mxu0
    %v273 = vadd.f32 %v253, %v272
    %274 = vdwg.mxu0
    %v275 = vmax.f32 %v273, 0.0
    %v276 = vld [vmem:[#allocation5 + $0x108] sm:$0xff]
    %v277 = vld [vmem:[#allocation5 + $0x110] sm:$0xff]
    %v278 = vld [vmem:[#allocation5 + $0x118] sm:$0xff]
    %v279 = vld [vmem:[#allocation5 + $0x120] sm:$0xff]
    %v280 = vld [vmem:[#allocation5 + $0x128] sm:$0xff]
    %v281 = vld [vmem:[#allocation5 + $0x130] sm:$0xff]
    %v282 = vld [vmem:[#allocation5 + $0x138] sm:$0xff]
    %v283 = vld [vmem:[#allocation5 + $0x140] sm:$0xff]
    %v284 = vld [vmem:[#allocation5 + $0x148] sm:$0xff]
    %v285 = vld [vmem:[#allocation5 + $0x150] sm:$0xff]
    %v286 = vld [vmem:[#allocation5 + $0x158] sm:$0xff]
    %v287 = vld [vmem:[#allocation5 + $0x160] sm:$0xff]
    %v288 = vld [vmem:[#allocation5 + $0x168] sm:$0xff]
    %v289 = vld [vmem:[#allocation5 + $0x170] sm:$0xff]
    %v290 = vld [vmem:[#allocation5 + $0x178] sm:$0xff]
    %v291 = vld [vmem:[#allocation5 + $0x180] sm:$0xff]
    %s292 = sld [smem:[#allocation2 + $0x10]]
    %v293 = vstv %s292
    %v294 = vmul.f32 %v186, %v293
    %s295 = sld [smem:[#allocation2 + $0x11]]
    %v296 = vstv %s295
    %v297 = vmul.f32 %v275, %v296
    %v298 = vadd.f32 %v294, %v297
    %v299 = vld [vmem:[#allocation5 + $0x188] sm:$0x1]
    %v300 = vperm.slane %v299, 0
    %301 = vmatpush.msra.mxu0 %v291
    %302 = vmatpush.msra.mxu0 %v290
    %303 = vmatpush.msra.mxu0 %v289
    %304 = vmatpush.msra.mxu0 %v288
    %305 = vmatpush.msra.mxu0 %v287
    %306 = vmatpush.msra.mxu0 %v286
    %307 = vmatpush.msra.mxu0 %v285
    %308 = vmatpush.msra.mxu0 %v284
    %309 = vmatpush.msra.mxu0 %v283
    %310 = vmatpush.msra.mxu0 %v282
    %311 = vmatpush.msra.mxu0 %v281
    %312 = vmatpush.msra.mxu0 %v280
    %313 = vmatpush.msra.mxu0 %v279
    %314 = vmatpush.msra.mxu0 %v278
    %315 = vmatpush.msra.mxu0 %v277
    %316 = vmatpush.msra.mxu0 %v276
    %317 = vmatmul.f32.gmra.mxu0 %v298
    %v318 = vpop.f32.mrf.mxu0
    %v319 = vadd.f32 %v300, %v318
    %320 = vdwg.mxu0
    %v321 = vmax.f32 %v319, 0.0
    %vm322 = vcmask 523264
    %323 = vst.msk [vmem:[%s3] sm:$0xff] %vm322, %v321
    // Predicated region
    $region22: #{fwd.1} parent=1 // pred_check
      _
    $region23: #{fwd.1} parent=1 // pred_check_branch
      %325 = sbr.rel (0) target = $region25
    $region24: #{fwd.1} parent=1 // pred_region
      _
    $region25: #{fwd.1} parent=1 // pred_fallthru
      _
    // Predicated region
    $region26: #{fwd.1} parent=1 // pred_check
      _
    $region27: #{fwd.1} parent=1 // pred_check_branch
      %327 = sbr.rel (0) target = $region29
    $region28: #{fwd.1} parent=1 // pred_region
      _
    $region29: #{fwd.1} parent=1 // pred_fallthru
      _
    %328 = vsyncpa [#allocation3], 1
    %329 = vsyncpa [#allocation4], 1

</llo_original>
